<compile_context>
chip_gen: v7x
topology: tpu7x:2x2x1
jax: 0.10.0
libtpu: 0.0.40
codegen_flags: <defaults>
</compile_context>

<pallas_src>
import jax
import jax.numpy as jnp
from jax.experimental import pallas as pl
from jax.experimental.pallas import tpu as pltpu


def _round_up(a, m):
    return (a + m - 1) // m * m


def _pack_params(h_weights, h_biases, o_weights, o_biases):
    """Flatten conv params into one 1-D f32 vector + static offsets.

    Only the taps that survive the A/B masks are packed:
      hidden conv 0 (mask 'A'):  tap k=0 only
      hidden conv i>0 (mask 'B') and out convs (mask 'B'): taps k=0, 1
    Reading only these taps is exactly `weight.data *= mask` + full conv,
    since the dropped taps are masked to zero.
    """
    pieces = []
    h_off, o_off = [], []
    off = 0

    def _add(arr):
        nonlocal off
        flat = jnp.asarray(arr, jnp.float32).reshape(-1)
        pieces.append(flat)
        start = off
        off += flat.shape[0]
        return start

    # hidden conv 0: (H, 1, 3), mask 'A' -> keep w[:, :, 0] only
    h_off.append({
        "w0": _add(h_weights[0][:, :, 0]),      # H scalars (Cin = 1)
        "b": _add(h_biases[0]),                 # H
    })
    # hidden convs 1..n_h-1: (H, H, 3), mask 'B' -> keep taps 0, 1
    for i in range(1, len(h_weights)):
        w = h_weights[i]
        h_off.append({
            "w0": _add(w[:, :, 0]),             # (H, H) row-major (co, ci)
            "w1": _add(w[:, :, 1]),
            "b": _add(h_biases[i]),
        })
    # out convs: (1, H, 3), mask 'B'
    for j in range(len(o_weights)):
        w = o_weights[j]
        o_off.append({
            "w0": _add(w[0, :, 0]),             # (H,)
            "w1": _add(w[0, :, 1]),
            "b": _add(o_biases[j]),             # 1
        })
    return jnp.concatenate(pieces), h_off, o_off


def _make_kernel(n_h, n_out, H, L, b_tile, chunk, h_off, o_off, alpha):
    n_chunks = b_tile // chunk

    def celu(v):
        # CELU(alpha); exp only ever evaluated on the non-positive branch.
        neg = alpha * (jnp.exp(jnp.minimum(v, 0.0) * (1.0 / alpha)) - 1.0)
        return jnp.where(v > 0, v, neg)

    def kernel(p_ref, x_ref, ctx_ref, out_ref):
        # p_ref:   (P,)               f32  SMEM (scalar-prefetched flat params)
        # x_ref:   (1, L, B_TILE)     f32  VMEM (batch on lanes)
        # ctx_ref: (H, L, B_TILE)     f32  VMEM
        # out_ref: (n_out, L, B_TILE) f32  VMEM

        # ---- hoist all SMEM scalar reads above the lane-chunk loop ----
        o0 = h_off[0]
        w0_c0 = [p_ref[o0["w0"] + co] for co in range(H)]
        b_c0 = [p_ref[o0["b"] + co] for co in range(H)]
        hidden_w = []
        for i in range(1, n_h):
            o = h_off[i]
            w0 = [[p_ref[o["w0"] + co * H + ci] for ci in range(H)] for co in range(H)]
            w1 = [[p_ref[o["w1"] + co * H + ci] for ci in range(H)] for co in range(H)]
            b = [p_ref[o["b"] + co] for co in range(H)]
            hidden_w.append((w0, w1, b))
        out_w = []
        for j in range(n_out):
            o = o_off[j]
            w0 = [p_ref[o["w0"] + ci] for ci in range(H)]
            w1 = [p_ref[o["w1"] + ci] for ci in range(H)]
            out_w.append((w0, w1, p_ref[o["b"]]))

        # Causal shift along L (sublane axis): out[t] = a[t-1], out[0] = 0.
        # XLU roll + iota mask (no concatenate/slice VMEM copies).
        row0 = jax.lax.broadcasted_iota(jnp.int32, (L, chunk), 0) == 0

        def shift_prev(a):
            return jnp.where(row0, 0.0, pltpu.roll(a, shift=1, axis=0))

        for c in range(n_chunks):
            lanes = pl.ds(c * chunk, chunk)

            # ---- hidden conv 0: mask 'A', Cin=1 -> only tap k=0 (x[t-1]);
            # context is added after conv 0, before the activation. ----
            x_prev = shift_prev(x_ref[0, :, lanes])
            h = [celu(w0_c0[co] * x_prev + b_c0[co] + ctx_ref[co, :, lanes])
                 for co in range(H)]

            # ---- hidden convs 1..n_h-1: mask 'B' -> taps 0,1.  The causal
            # shift is applied to the tap-0 accumulator (shift is linear), so
            # one shift per output channel and no h_prev list is kept live. ----
            for (w0, w1, b) in hidden_w:
                new_h = []
                for co in range(H):
                    acc0 = w0[co][0] * h[0]
                    acc1 = w1[co][0] * h[0]
                    for ci in range(1, H):
                        acc0 = acc0 + w0[co][ci] * h[ci]
                        acc1 = acc1 + w1[co][ci] * h[ci]
                    new_h.append(celu(shift_prev(acc0) + acc1 + b[co]))
                h = new_h

            # ---- out convs: mask 'B', Cout=1 -> taps 0,1 (same trick). ----
            for j, (w0, w1, b) in enumerate(out_w):
                acc0 = w0[0] * h[0]
                acc1 = w1[0] * h[0]
                for ci in range(1, H):
                    acc0 = acc0 + w0[ci] * h[ci]
                    acc1 = acc1 + w1[ci] * h[ci]
                out_ref[j, :, lanes] = (shift_prev(acc0) + acc1 + b).astype(out_ref.dtype)

    return kernel


def ar_multi_conv(x, context, h_weights, h_biases, o_weights, o_biases,
                  *, b_tile=None, alpha=1.0):
    """ARMultiConv forward.

    x: (N, 1, L); context: (N, H, L); raw Conv1d weights (Cout, Cin, 3) — the
    A/B masking is applied implicitly by the kernel (only unmasked taps are
    read), matching MaskedConv.forward.  Returns a list of n_out (N, 1, L).
    """
    N, _, L = x.shape
    H = context.shape[1]
    n_h, n_out = len(h_weights), len(o_weights)

    params, h_off, o_off = _pack_params(h_weights, h_biases, o_weights, o_biases)

    # ---- batch tile ------------------------------------------------------
    # Lane-dense (multiple of 128).  Per-step double-buffered traffic is
    # 2*(1+H+n_out)*L*4 bytes/lane, so even at the 4096-lane cap the footprint
    # is ~3.5 MiB (H=4, n_out=2, L=16) — the cap / batch size, not VMEM, is
    # the binding constraint on every generation (v5e 16 MiB scoped default,
    # v6e/v7x 32 MiB scoped; raise vmem_limit_bytes if you ever push past it).
    n128 = _round_up(N, 128)
    if b_tile is None:
        per_lane_bytes = 2 * (1 + H + n_out) * L * 4
        budget = 16 * 1024 * 1024
        b_tile = min(4096, max(128, (budget // per_lane_bytes) // 128 * 128))
    b_tile = min(_round_up(b_tile, 128), n128)
    # v7x has 2 TensorCores: keep >= 2 (balanced) grid steps whenever the
    # padded batch allows it so dimension_semantics=("parallel",) uses both.
    if n128 >= 256:
        b_tile = min(b_tile, max(128, (n128 // 2) // 128 * 128))
    Np = _round_up(N, b_tile)
    chunk = 256 if b_tile % 256 == 0 else 128   # in-kernel lane-chunk size

    # Lane-dense layout: (channels, L, batch) with batch on the lane axis.
    # (L=16 < 128 here, so L cannot take the lane axis; the transposes stay
    #  inside this single jitted function.)
    xT = jnp.transpose(x.astype(jnp.float32), (1, 2, 0))        # (1, L, N)
    cT = jnp.transpose(context.astype(jnp.float32), (1, 2, 0))  # (H, L, N)
    if Np != N:
        pad = ((0, 0), (0, 0), (0, Np - N))
        xT = jnp.pad(xT, pad)
        cT = jnp.pad(cT, pad)

    kernel = _make_kernel(n_h, n_out, H, L, b_tile, chunk, h_off, o_off, alpha)

    stacked = pl.pallas_call(
        kernel,
        grid_spec=pltpu.PrefetchScalarGridSpec(
            num_scalar_prefetch=1,                               # flat params -> SMEM once
            grid=(Np // b_tile,),
            in_specs=[
                pl.BlockSpec((1, L, b_tile), lambda b, p: (0, 0, b)),    # x
                pl.BlockSpec((H, L, b_tile), lambda b, p: (0, 0, b)),    # context
            ],
            out_specs=pl.BlockSpec((n_out, L, b_tile), lambda b, p: (0, 0, b)),
        ),
        out_shape=jax.ShapeDtypeStruct((n_out, L, Np), jnp.float32),
        compiler_params=pltpu.CompilerParams(
            dimension_semantics=("parallel",)),
    )(params, xT, cT)

    # One fused transpose for all n_out outputs: (n_out, L, N) -> (n_out, N, 1, L)
    outs = jnp.transpose(stacked[:, :, :N], (0, 2, 1))[:, :, None, :]
    return [outs[j] for j in range(n_out)]


ar_multi_conv_jit = jax.jit(ar_multi_conv, static_argnames=("b_tile", "alpha"))


# ----------------------- pure-JAX reference (check) -----------------------

def mask_weight(w, mask_type):
    # MaskedConv: mask[:, :, L//2 + (mask_type == 'B'):] = 0  (kernel size 3)
    Lk = w.shape[-1]
    cut = Lk // 2 + (1 if mask_type == 'B' else 0)
    return w * jnp.ones_like(w).at[:, :, cut:].set(0.0)


def ref_forward(x, context, h_weights, h_biases, o_weights, o_biases):
    def conv(x, w, b):
        N, Cin, L = x.shape
        xpad = jnp.pad(x, ((0, 0), (0, 0), (1, 1)))
        out = jnp.zeros((N, w.shape[0], L), jnp.float32)
        for k in range(3):
            out = out + jnp.einsum('oc,bcl->bol', w[:, :, k], xpad[:, :, k:k + L])
        return out + b[None, :, None]

    def celu(v):
        return jnp.where(v > 0, v, jnp.exp(jnp.minimum(v, 0.0)) - 1.0)

    mts = ['A'] + ['B'] * (len(h_weights) - 1)
    for i, (w, b, mt) in enumerate(zip(h_weights, h_biases, mts)):
        x = conv(x, mask_weight(w, mt), b)
        if i == 0:
            x = x + context
        x = celu(x)
    return [conv(x, mask_weight(w, 'B'), b) for w, b in zip(o_weights, o_biases)]


if __name__ == "__main__":
    # args.h_channel = 4, n_h = 2, n_out = 2; small shapes.
    n_h, n_out, h_channel = 2, 2, 4
    N, L = 2, 16

    key = jax.random.PRNGKey(0)
    keys = jax.random.split(key, n_h + n_out + 2)

    def init_conv(k, cout, cin, ksize=3):
        kw, kb = jax.random.split(k)
        bound = 1.0 / float(cin * ksize) ** 0.5
        w = jax.random.uniform(kw, (cout, cin, ksize), jnp.float32, -bound, bound)
        b = jax.random.uniform(kb, (cout,), jnp.float32, -bound, bound)
        return w, b

    h_weights, h_biases, o_weights, o_biases = [], [], [], []
    for i in range(n_h):
        cin = 1 if i == 0 else h_channel
        w, b = init_conv(keys[i], h_channel, cin)
        h_weights.append(w)
        h_biases.append(b)
    for j in range(n_out):
        w, b = init_conv(keys[n_h + j], 1, h_channel)
        o_weights.append(w)
        o_biases.append(b)

    x = jax.random.normal(keys[-2], (N, 1, L), jnp.float32)
    context = jax.random.normal(keys[-1], (N, h_channel, L), jnp.float32)

    outs = ar_multi_conv_jit(x, context, h_weights, h_biases, o_weights, o_biases,
                             b_tile=None, alpha=1.0)
    outs = jax.block_until_ready(outs)

    refs = ref_forward(x, context, h_weights, h_biases, o_weights, o_biases)
    for o, r in zip(outs, refs):
        assert o.shape == (N, 1, L)
        assert jnp.allclose(o, r, atol=1e-5, rtol=1e-5), "mismatch vs reference"

    print("KERNEL_OK")
</pallas_src>

<mosaic_0001>
module attributes {stable_mosaic.version = 11 : i64} {
  func.func @kernel(%arg0: i32, %arg1: memref<62xf32, #tpu.memory_space<smem>>, %arg2: memref<1x16x128xf32, #tpu.memory_space<vmem>>, %arg3: memref<4x16x128xf32, #tpu.memory_space<vmem>>, %arg4: memref<2x16x128xf32, #tpu.memory_space<vmem>>) attributes {dimension_semantics = [#tpu.dimension_semantics<parallel>], iteration_bounds = array<i64: 1>, scalar_prefetch = 1 : i64, scratch_operands = 0 : i64, tpu.core_type = #tpu.core_type<tc>, window_params = [{transform_indices = @transform_0, window_bounds = array<i64: 1, 16, 128>}, {transform_indices = @transform_1, window_bounds = array<i64: 4, 16, 128>}, {transform_indices = @transform_2, window_bounds = array<i64: 2, 16, 128>}]} {
    %c0 = arith.constant 0 : index
    %0 = memref.load %arg1[%c0] : memref<62xf32, #tpu.memory_space<smem>>
    %c1 = arith.constant 1 : index
    %1 = memref.load %arg1[%c1] : memref<62xf32, #tpu.memory_space<smem>>
    %c2 = arith.constant 2 : index
    %2 = memref.load %arg1[%c2] : memref<62xf32, #tpu.memory_space<smem>>
    %c3 = arith.constant 3 : index
    %3 = memref.load %arg1[%c3] : memref<62xf32, #tpu.memory_space<smem>>
    %c4 = arith.constant 4 : index
    %4 = memref.load %arg1[%c4] : memref<62xf32, #tpu.memory_space<smem>>
    %c5 = arith.constant 5 : index
    %5 = memref.load %arg1[%c5] : memref<62xf32, #tpu.memory_space<smem>>
    %c6 = arith.constant 6 : index
    %6 = memref.load %arg1[%c6] : memref<62xf32, #tpu.memory_space<smem>>
    %c7 = arith.constant 7 : index
    %7 = memref.load %arg1[%c7] : memref<62xf32, #tpu.memory_space<smem>>
    %c8 = arith.constant 8 : index
    %8 = memref.load %arg1[%c8] : memref<62xf32, #tpu.memory_space<smem>>
    %c9 = arith.constant 9 : index
    %9 = memref.load %arg1[%c9] : memref<62xf32, #tpu.memory_space<smem>>
    %c10 = arith.constant 10 : index
    %10 = memref.load %arg1[%c10] : memref<62xf32, #tpu.memory_space<smem>>
    %c11 = arith.constant 11 : index
    %11 = memref.load %arg1[%c11] : memref<62xf32, #tpu.memory_space<smem>>
    %c12 = arith.constant 12 : index
    %12 = memref.load %arg1[%c12] : memref<62xf32, #tpu.memory_space<smem>>
    %c13 = arith.constant 13 : index
    %13 = memref.load %arg1[%c13] : memref<62xf32, #tpu.memory_space<smem>>
    %c14 = arith.constant 14 : index
    %14 = memref.load %arg1[%c14] : memref<62xf32, #tpu.memory_space<smem>>
    %c15 = arith.constant 15 : index
    %15 = memref.load %arg1[%c15] : memref<62xf32, #tpu.memory_space<smem>>
    %c16 = arith.constant 16 : index
    %16 = memref.load %arg1[%c16] : memref<62xf32, #tpu.memory_space<smem>>
    %c17 = arith.constant 17 : index
    %17 = memref.load %arg1[%c17] : memref<62xf32, #tpu.memory_space<smem>>
    %c18 = arith.constant 18 : index
    %18 = memref.load %arg1[%c18] : memref<62xf32, #tpu.memory_space<smem>>
    %c19 = arith.constant 19 : index
    %19 = memref.load %arg1[%c19] : memref<62xf32, #tpu.memory_space<smem>>
    %c20 = arith.constant 20 : index
    %20 = memref.load %arg1[%c20] : memref<62xf32, #tpu.memory_space<smem>>
    %c21 = arith.constant 21 : index
    %21 = memref.load %arg1[%c21] : memref<62xf32, #tpu.memory_space<smem>>
    %c22 = arith.constant 22 : index
    %22 = memref.load %arg1[%c22] : memref<62xf32, #tpu.memory_space<smem>>
    %c23 = arith.constant 23 : index
    %23 = memref.load %arg1[%c23] : memref<62xf32, #tpu.memory_space<smem>>
    %c24 = arith.constant 24 : index
    %24 = memref.load %arg1[%c24] : memref<62xf32, #tpu.memory_space<smem>>
    %c25 = arith.constant 25 : index
    %25 = memref.load %arg1[%c25] : memref<62xf32, #tpu.memory_space<smem>>
    %c26 = arith.constant 26 : index
    %26 = memref.load %arg1[%c26] : memref<62xf32, #tpu.memory_space<smem>>
    %c27 = arith.constant 27 : index
    %27 = memref.load %arg1[%c27] : memref<62xf32, #tpu.memory_space<smem>>
    %c28 = arith.constant 28 : index
    %28 = memref.load %arg1[%c28] : memref<62xf32, #tpu.memory_space<smem>>
    %c29 = arith.constant 29 : index
    %29 = memref.load %arg1[%c29] : memref<62xf32, #tpu.memory_space<smem>>
    %c30 = arith.constant 30 : index
    %30 = memref.load %arg1[%c30] : memref<62xf32, #tpu.memory_space<smem>>
    %c31 = arith.constant 31 : index
    %31 = memref.load %arg1[%c31] : memref<62xf32, #tpu.memory_space<smem>>
    %c32 = arith.constant 32 : index
    %32 = memref.load %arg1[%c32] : memref<62xf32, #tpu.memory_space<smem>>
    %c33 = arith.constant 33 : index
    %33 = memref.load %arg1[%c33] : memref<62xf32, #tpu.memory_space<smem>>
    %c34 = arith.constant 34 : index
    %34 = memref.load %arg1[%c34] : memref<62xf32, #tpu.memory_space<smem>>
    %c35 = arith.constant 35 : index
    %35 = memref.load %arg1[%c35] : memref<62xf32, #tpu.memory_space<smem>>
    %c36 = arith.constant 36 : index
    %36 = memref.load %arg1[%c36] : memref<62xf32, #tpu.memory_space<smem>>
    %c37 = arith.constant 37 : index
    %37 = memref.load %arg1[%c37] : memref<62xf32, #tpu.memory_space<smem>>
    %c38 = arith.constant 38 : index
    %38 = memref.load %arg1[%c38] : memref<62xf32, #tpu.memory_space<smem>>
    %c39 = arith.constant 39 : index
    %39 = memref.load %arg1[%c39] : memref<62xf32, #tpu.memory_space<smem>>
    %c40 = arith.constant 40 : index
    %40 = memref.load %arg1[%c40] : memref<62xf32, #tpu.memory_space<smem>>
    %c41 = arith.constant 41 : index
    %41 = memref.load %arg1[%c41] : memref<62xf32, #tpu.memory_space<smem>>
    %c42 = arith.constant 42 : index
    %42 = memref.load %arg1[%c42] : memref<62xf32, #tpu.memory_space<smem>>
    %c43 = arith.constant 43 : index
    %43 = memref.load %arg1[%c43] : memref<62xf32, #tpu.memory_space<smem>>
    %c44 = arith.constant 44 : index
    %44 = memref.load %arg1[%c44] : memref<62xf32, #tpu.memory_space<smem>>
    %c45 = arith.constant 45 : index
    %45 = memref.load %arg1[%c45] : memref<62xf32, #tpu.memory_space<smem>>
    %c46 = arith.constant 46 : index
    %46 = memref.load %arg1[%c46] : memref<62xf32, #tpu.memory_space<smem>>
    %c47 = arith.constant 47 : index
    %47 = memref.load %arg1[%c47] : memref<62xf32, #tpu.memory_space<smem>>
    %c48 = arith.constant 48 : index
    %48 = memref.load %arg1[%c48] : memref<62xf32, #tpu.memory_space<smem>>
    %c49 = arith.constant 49 : index
    %49 = memref.load %arg1[%c49] : memref<62xf32, #tpu.memory_space<smem>>
    %c50 = arith.constant 50 : index
    %50 = memref.load %arg1[%c50] : memref<62xf32, #tpu.memory_space<smem>>
    %c51 = arith.constant 51 : index
    %51 = memref.load %arg1[%c51] : memref<62xf32, #tpu.memory_space<smem>>
    %c52 = arith.constant 52 : index
    %52 = memref.load %arg1[%c52] : memref<62xf32, #tpu.memory_space<smem>>
    %c53 = arith.constant 53 : index
    %53 = memref.load %arg1[%c53] : memref<62xf32, #tpu.memory_space<smem>>
    %c54 = arith.constant 54 : index
    %54 = memref.load %arg1[%c54] : memref<62xf32, #tpu.memory_space<smem>>
    %c55 = arith.constant 55 : index
    %55 = memref.load %arg1[%c55] : memref<62xf32, #tpu.memory_space<smem>>
    %c56 = arith.constant 56 : index
    %56 = memref.load %arg1[%c56] : memref<62xf32, #tpu.memory_space<smem>>
    %c57 = arith.constant 57 : index
    %57 = memref.load %arg1[%c57] : memref<62xf32, #tpu.memory_space<smem>>
    %c58 = arith.constant 58 : index
    %58 = memref.load %arg1[%c58] : memref<62xf32, #tpu.memory_space<smem>>
    %c59 = arith.constant 59 : index
    %59 = memref.load %arg1[%c59] : memref<62xf32, #tpu.memory_space<smem>>
    %c60 = arith.constant 60 : index
    %60 = memref.load %arg1[%c60] : memref<62xf32, #tpu.memory_space<smem>>
    %c61 = arith.constant 61 : index
    %61 = memref.load %arg1[%c61] : memref<62xf32, #tpu.memory_space<smem>>
    %62 = tpu.iota {dimensions = array<i32: 0>} : vector<16x128xi32>
    %c0_i32 = arith.constant 0 : i32
    %63 = vector.broadcast %c0_i32 : i32 to vector<16x128xi32>
    %64 = arith.cmpi eq, %62, %63 : vector<16x128xi32>
    %c0_0 = arith.constant 0 : index
    %c0_1 = arith.constant 0 : index
    %c0_2 = arith.constant 0 : index
    %65 = vector.load %arg2[%c0_0, %c0_1, %c0_2] : memref<1x16x128xf32, #tpu.memory_space<vmem>>, vector<1x16x128xf32>
    %66 = vector.shape_cast %65 : vector<1x16x128xf32> to vector<16x128xf32>
    %c1_i32 = arith.constant 1 : i32
    %67 = tpu.dynamic_rotate %66 by %c1_i32 dim 0 : vector<16x128xf32>, i32 -> vector<16x128xf32>
    %cst = arith.constant 0.000000e+00 : f32
    %68 = vector.broadcast %cst : f32 to vector<16x128xf32>
    %69 = arith.select %64, %68, %67 : vector<16x128xi1>, vector<16x128xf32>
    %70 = vector.broadcast %0 : f32 to vector<16x128xf32>
    %71 = arith.mulf %70, %69 : vector<16x128xf32>
    %72 = vector.broadcast %4 : f32 to vector<16x128xf32>
    %73 = arith.addf %71, %72 : vector<16x128xf32>
    %c0_3 = arith.constant 0 : index
    %c0_4 = arith.constant 0 : index
    %c0_5 = arith.constant 0 : index
    %74 = vector.load %arg3[%c0_3, %c0_4, %c0_5] : memref<4x16x128xf32, #tpu.memory_space<vmem>>, vector<1x16x128xf32>
    %75 = vector.shape_cast %74 : vector<1x16x128xf32> to vector<16x128xf32>
    %76 = arith.addf %73, %75 : vector<16x128xf32>
    %cst_6 = arith.constant 0.000000e+00 : f32
    %77 = vector.broadcast %cst_6 : f32 to vector<16x128xf32>
    %78 = arith.minimumf %76, %77 : vector<16x128xf32>
    %cst_7 = arith.constant 1.000000e+00 : f32
    %79 = vector.broadcast %cst_7 : f32 to vector<16x128xf32>
    %80 = arith.mulf %78, %79 : vector<16x128xf32>
    %81 = math.exp %80 : vector<16x128xf32>
    %cst_8 = arith.constant 1.000000e+00 : f32
    %82 = vector.broadcast %cst_8 : f32 to vector<16x128xf32>
    %83 = arith.subf %81, %82 : vector<16x128xf32>
    %cst_9 = arith.constant 1.000000e+00 : f32
    %84 = vector.broadcast %cst_9 : f32 to vector<16x128xf32>
    %85 = arith.mulf %84, %83 : vector<16x128xf32>
    %cst_10 = arith.constant 0.000000e+00 : f32
    %86 = vector.broadcast %cst_10 : f32 to vector<16x128xf32>
    %87 = arith.cmpf ogt, %76, %86 : vector<16x128xf32>
    %88 = arith.select %87, %76, %85 : vector<16x128xi1>, vector<16x128xf32>
    %89 = vector.broadcast %1 : f32 to vector<16x128xf32>
    %90 = arith.mulf %89, %69 : vector<16x128xf32>
    %91 = vector.broadcast %5 : f32 to vector<16x128xf32>
    %92 = arith.addf %90, %91 : vector<16x128xf32>
    %c1_11 = arith.constant 1 : index
    %c0_12 = arith.constant 0 : index
    %c0_13 = arith.constant 0 : index
    %93 = vector.load %arg3[%c1_11, %c0_12, %c0_13] : memref<4x16x128xf32, #tpu.memory_space<vmem>>, vector<1x16x128xf32>
    %94 = vector.shape_cast %93 : vector<1x16x128xf32> to vector<16x128xf32>
    %95 = arith.addf %92, %94 : vector<16x128xf32>
    %cst_14 = arith.constant 0.000000e+00 : f32
    %96 = vector.broadcast %cst_14 : f32 to vector<16x128xf32>
    %97 = arith.minimumf %95, %96 : vector<16x128xf32>
    %cst_15 = arith.constant 1.000000e+00 : f32
    %98 = vector.broadcast %cst_15 : f32 to vector<16x128xf32>
    %99 = arith.mulf %97, %98 : vector<16x128xf32>
    %100 = math.exp %99 : vector<16x128xf32>
    %cst_16 = arith.constant 1.000000e+00 : f32
    %101 = vector.broadcast %cst_16 : f32 to vector<16x128xf32>
    %102 = arith.subf %100, %101 : vector<16x128xf32>
    %cst_17 = arith.constant 1.000000e+00 : f32
    %103 = vector.broadcast %cst_17 : f32 to vector<16x128xf32>
    %104 = arith.mulf %103, %102 : vector<16x128xf32>
    %cst_18 = arith.constant 0.000000e+00 : f32
    %105 = vector.broadcast %cst_18 : f32 to vector<16x128xf32>
    %106 = arith.cmpf ogt, %95, %105 : vector<16x128xf32>
    %107 = arith.select %106, %95, %104 : vector<16x128xi1>, vector<16x128xf32>
    %108 = vector.broadcast %2 : f32 to vector<16x128xf32>
    %109 = arith.mulf %108, %69 : vector<16x128xf32>
    %110 = vector.broadcast %6 : f32 to vector<16x128xf32>
    %111 = arith.addf %109, %110 : vector<16x128xf32>
    %c2_19 = arith.constant 2 : index
    %c0_20 = arith.constant 0 : index
    %c0_21 = arith.constant 0 : index
    %112 = vector.load %arg3[%c2_19, %c0_20, %c0_21] : memref<4x16x128xf32, #tpu.memory_space<vmem>>, vector<1x16x128xf32>
    %113 = vector.shape_cast %112 : vector<1x16x128xf32> to vector<16x128xf32>
    %114 = arith.addf %111, %113 : vector<16x128xf32>
    %cst_22 = arith.constant 0.000000e+00 : f32
    %115 = vector.broadcast %cst_22 : f32 to vector<16x128xf32>
    %116 = arith.minimumf %114, %115 : vector<16x128xf32>
    %cst_23 = arith.constant 1.000000e+00 : f32
    %117 = vector.broadcast %cst_23 : f32 to vector<16x128xf32>
    %118 = arith.mulf %116, %117 : vector<16x128xf32>
    %119 = math.exp %118 : vector<16x128xf32>
    %cst_24 = arith.constant 1.000000e+00 : f32
    %120 = vector.broadcast %cst_24 : f32 to vector<16x128xf32>
    %121 = arith.subf %119, %120 : vector<16x128xf32>
    %cst_25 = arith.constant 1.000000e+00 : f32
    %122 = vector.broadcast %cst_25 : f32 to vector<16x128xf32>
    %123 = arith.mulf %122, %121 : vector<16x128xf32>
    %cst_26 = arith.constant 0.000000e+00 : f32
    %124 = vector.broadcast %cst_26 : f32 to vector<16x128xf32>
    %125 = arith.cmpf ogt, %114, %124 : vector<16x128xf32>
    %126 = arith.select %125, %114, %123 : vector<16x128xi1>, vector<16x128xf32>
    %127 = vector.broadcast %3 : f32 to vector<16x128xf32>
    %128 = arith.mulf %127, %69 : vector<16x128xf32>
    %129 = vector.broadcast %7 : f32 to vector<16x128xf32>
    %130 = arith.addf %128, %129 : vector<16x128xf32>
    %c3_27 = arith.constant 3 : index
    %c0_28 = arith.constant 0 : index
    %c0_29 = arith.constant 0 : index
    %131 = vector.load %arg3[%c3_27, %c0_28, %c0_29] : memref<4x16x128xf32, #tpu.memory_space<vmem>>, vector<1x16x128xf32>
    %132 = vector.shape_cast %131 : vector<1x16x128xf32> to vector<16x128xf32>
    %133 = arith.addf %130, %132 : vector<16x128xf32>
    %cst_30 = arith.constant 0.000000e+00 : f32
    %134 = vector.broadcast %cst_30 : f32 to vector<16x128xf32>
    %135 = arith.minimumf %133, %134 : vector<16x128xf32>
    %cst_31 = arith.constant 1.000000e+00 : f32
    %136 = vector.broadcast %cst_31 : f32 to vector<16x128xf32>
    %137 = arith.mulf %135, %136 : vector<16x128xf32>
    %138 = math.exp %137 : vector<16x128xf32>
    %cst_32 = arith.constant 1.000000e+00 : f32
    %139 = vector.broadcast %cst_32 : f32 to vector<16x128xf32>
    %140 = arith.subf %138, %139 : vector<16x128xf32>
    %cst_33 = arith.constant 1.000000e+00 : f32
    %141 = vector.broadcast %cst_33 : f32 to vector<16x128xf32>
    %142 = arith.mulf %141, %140 : vector<16x128xf32>
    %cst_34 = arith.constant 0.000000e+00 : f32
    %143 = vector.broadcast %cst_34 : f32 to vector<16x128xf32>
    %144 = arith.cmpf ogt, %133, %143 : vector<16x128xf32>
    %145 = arith.select %144, %133, %142 : vector<16x128xi1>, vector<16x128xf32>
    %146 = vector.broadcast %8 : f32 to vector<16x128xf32>
    %147 = arith.mulf %146, %88 : vector<16x128xf32>
    %148 = vector.broadcast %24 : f32 to vector<16x128xf32>
    %149 = arith.mulf %148, %88 : vector<16x128xf32>
    %150 = vector.broadcast %9 : f32 to vector<16x128xf32>
    %151 = arith.mulf %150, %107 : vector<16x128xf32>
    %152 = arith.addf %147, %151 : vector<16x128xf32>
    %153 = vector.broadcast %25 : f32 to vector<16x128xf32>
    %154 = arith.mulf %153, %107 : vector<16x128xf32>
    %155 = arith.addf %149, %154 : vector<16x128xf32>
    %156 = vector.broadcast %10 : f32 to vector<16x128xf32>
    %157 = arith.mulf %156, %126 : vector<16x128xf32>
    %158 = arith.addf %152, %157 : vector<16x128xf32>
    %159 = vector.broadcast %26 : f32 to vector<16x128xf32>
    %160 = arith.mulf %159, %126 : vector<16x128xf32>
    %161 = arith.addf %155, %160 : vector<16x128xf32>
    %162 = vector.broadcast %11 : f32 to vector<16x128xf32>
    %163 = arith.mulf %162, %145 : vector<16x128xf32>
    %164 = arith.addf %158, %163 : vector<16x128xf32>
    %165 = vector.broadcast %27 : f32 to vector<16x128xf32>
    %166 = arith.mulf %165, %145 : vector<16x128xf32>
    %167 = arith.addf %161, %166 : vector<16x128xf32>
    %c1_i32_35 = arith.constant 1 : i32
    %168 = tpu.dynamic_rotate %164 by %c1_i32_35 dim 0 : vector<16x128xf32>, i32 -> vector<16x128xf32>
    %cst_36 = arith.constant 0.000000e+00 : f32
    %169 = vector.broadcast %cst_36 : f32 to vector<16x128xf32>
    %170 = arith.select %64, %169, %168 : vector<16x128xi1>, vector<16x128xf32>
    %171 = arith.addf %170, %167 : vector<16x128xf32>
    %172 = vector.broadcast %40 : f32 to vector<16x128xf32>
    %173 = arith.addf %171, %172 : vector<16x128xf32>
    %cst_37 = arith.constant 0.000000e+00 : f32
    %174 = vector.broadcast %cst_37 : f32 to vector<16x128xf32>
    %175 = arith.minimumf %173, %174 : vector<16x128xf32>
    %cst_38 = arith.constant 1.000000e+00 : f32
    %176 = vector.broadcast %cst_38 : f32 to vector<16x128xf32>
    %177 = arith.mulf %175, %176 : vector<16x128xf32>
    %178 = math.exp %177 : vector<16x128xf32>
    %cst_39 = arith.constant 1.000000e+00 : f32
    %179 = vector.broadcast %cst_39 : f32 to vector<16x128xf32>
    %180 = arith.subf %178, %179 : vector<16x128xf32>
    %cst_40 = arith.constant 1.000000e+00 : f32
    %181 = vector.broadcast %cst_40 : f32 to vector<16x128xf32>
    %182 = arith.mulf %181, %180 : vector<16x128xf32>
    %cst_41 = arith.constant 0.000000e+00 : f32
    %183 = vector.broadcast %cst_41 : f32 to vector<16x128xf32>
    %184 = arith.cmpf ogt, %173, %183 : vector<16x128xf32>
    %185 = arith.select %184, %173, %182 : vector<16x128xi1>, vector<16x128xf32>
    %186 = vector.broadcast %12 : f32 to vector<16x128xf32>
    %187 = arith.mulf %186, %88 : vector<16x128xf32>
    %188 = vector.broadcast %28 : f32 to vector<16x128xf32>
    %189 = arith.mulf %188, %88 : vector<16x128xf32>
    %190 = vector.broadcast %13 : f32 to vector<16x128xf32>
    %191 = arith.mulf %190, %107 : vector<16x128xf32>
    %192 = arith.addf %187, %191 : vector<16x128xf32>
    %193 = vector.broadcast %29 : f32 to vector<16x128xf32>
    %194 = arith.mulf %193, %107 : vector<16x128xf32>
    %195 = arith.addf %189, %194 : vector<16x128xf32>
    %196 = vector.broadcast %14 : f32 to vector<16x128xf32>
    %197 = arith.mulf %196, %126 : vector<16x128xf32>
    %198 = arith.addf %192, %197 : vector<16x128xf32>
    %199 = vector.broadcast %30 : f32 to vector<16x128xf32>
    %200 = arith.mulf %199, %126 : vector<16x128xf32>
    %201 = arith.addf %195, %200 : vector<16x128xf32>
    %202 = vector.broadcast %15 : f32 to vector<16x128xf32>
    %203 = arith.mulf %202, %145 : vector<16x128xf32>
    %204 = arith.addf %198, %203 : vector<16x128xf32>
    %205 = vector.broadcast %31 : f32 to vector<16x128xf32>
    %206 = arith.mulf %205, %145 : vector<16x128xf32>
    %207 = arith.addf %201, %206 : vector<16x128xf32>
    %c1_i32_42 = arith.constant 1 : i32
    %208 = tpu.dynamic_rotate %204 by %c1_i32_42 dim 0 : vector<16x128xf32>, i32 -> vector<16x128xf32>
    %cst_43 = arith.constant 0.000000e+00 : f32
    %209 = vector.broadcast %cst_43 : f32 to vector<16x128xf32>
    %210 = arith.select %64, %209, %208 : vector<16x128xi1>, vector<16x128xf32>
    %211 = arith.addf %210, %207 : vector<16x128xf32>
    %212 = vector.broadcast %41 : f32 to vector<16x128xf32>
    %213 = arith.addf %211, %212 : vector<16x128xf32>
    %cst_44 = arith.constant 0.000000e+00 : f32
    %214 = vector.broadcast %cst_44 : f32 to vector<16x128xf32>
    %215 = arith.minimumf %213, %214 : vector<16x128xf32>
    %cst_45 = arith.constant 1.000000e+00 : f32
    %216 = vector.broadcast %cst_45 : f32 to vector<16x128xf32>
    %217 = arith.mulf %215, %216 : vector<16x128xf32>
    %218 = math.exp %217 : vector<16x128xf32>
    %cst_46 = arith.constant 1.000000e+00 : f32
    %219 = vector.broadcast %cst_46 : f32 to vector<16x128xf32>
    %220 = arith.subf %218, %219 : vector<16x128xf32>
    %cst_47 = arith.constant 1.000000e+00 : f32
    %221 = vector.broadcast %cst_47 : f32 to vector<16x128xf32>
    %222 = arith.mulf %221, %220 : vector<16x128xf32>
    %cst_48 = arith.constant 0.000000e+00 : f32
    %223 = vector.broadcast %cst_48 : f32 to vector<16x128xf32>
    %224 = arith.cmpf ogt, %213, %223 : vector<16x128xf32>
    %225 = arith.select %224, %213, %222 : vector<16x128xi1>, vector<16x128xf32>
    %226 = vector.broadcast %16 : f32 to vector<16x128xf32>
    %227 = arith.mulf %226, %88 : vector<16x128xf32>
    %228 = vector.broadcast %32 : f32 to vector<16x128xf32>
    %229 = arith.mulf %228, %88 : vector<16x128xf32>
    %230 = vector.broadcast %17 : f32 to vector<16x128xf32>
    %231 = arith.mulf %230, %107 : vector<16x128xf32>
    %232 = arith.addf %227, %231 : vector<16x128xf32>
    %233 = vector.broadcast %33 : f32 to vector<16x128xf32>
    %234 = arith.mulf %233, %107 : vector<16x128xf32>
    %235 = arith.addf %229, %234 : vector<16x128xf32>
    %236 = vector.broadcast %18 : f32 to vector<16x128xf32>
    %237 = arith.mulf %236, %126 : vector<16x128xf32>
    %238 = arith.addf %232, %237 : vector<16x128xf32>
    %239 = vector.broadcast %34 : f32 to vector<16x128xf32>
    %240 = arith.mulf %239, %126 : vector<16x128xf32>
    %241 = arith.addf %235, %240 : vector<16x128xf32>
    %242 = vector.broadcast %19 : f32 to vector<16x128xf32>
    %243 = arith.mulf %242, %145 : vector<16x128xf32>
    %244 = arith.addf %238, %243 : vector<16x128xf32>
    %245 = vector.broadcast %35 : f32 to vector<16x128xf32>
    %246 = arith.mulf %245, %145 : vector<16x128xf32>
    %247 = arith.addf %241, %246 : vector<16x128xf32>
    %c1_i32_49 = arith.constant 1 : i32
    %248 = tpu.dynamic_rotate %244 by %c1_i32_49 dim 0 : vector<16x128xf32>, i32 -> vector<16x128xf32>
    %cst_50 = arith.constant 0.000000e+00 : f32
    %249 = vector.broadcast %cst_50 : f32 to vector<16x128xf32>
    %250 = arith.select %64, %249, %248 : vector<16x128xi1>, vector<16x128xf32>
    %251 = arith.addf %250, %247 : vector<16x128xf32>
    %252 = vector.broadcast %42 : f32 to vector<16x128xf32>
    %253 = arith.addf %251, %252 : vector<16x128xf32>
    %cst_51 = arith.constant 0.000000e+00 : f32
    %254 = vector.broadcast %cst_51 : f32 to vector<16x128xf32>
    %255 = arith.minimumf %253, %254 : vector<16x128xf32>
    %cst_52 = arith.constant 1.000000e+00 : f32
    %256 = vector.broadcast %cst_52 : f32 to vector<16x128xf32>
    %257 = arith.mulf %255, %256 : vector<16x128xf32>
    %258 = math.exp %257 : vector<16x128xf32>
    %cst_53 = arith.constant 1.000000e+00 : f32
    %259 = vector.broadcast %cst_53 : f32 to vector<16x128xf32>
    %260 = arith.subf %258, %259 : vector<16x128xf32>
    %cst_54 = arith.constant 1.000000e+00 : f32
    %261 = vector.broadcast %cst_54 : f32 to vector<16x128xf32>
    %262 = arith.mulf %261, %260 : vector<16x128xf32>
    %cst_55 = arith.constant 0.000000e+00 : f32
    %263 = vector.broadcast %cst_55 : f32 to vector<16x128xf32>
    %264 = arith.cmpf ogt, %253, %263 : vector<16x128xf32>
    %265 = arith.select %264, %253, %262 : vector<16x128xi1>, vector<16x128xf32>
    %266 = vector.broadcast %20 : f32 to vector<16x128xf32>
    %267 = arith.mulf %266, %88 : vector<16x128xf32>
    %268 = vector.broadcast %36 : f32 to vector<16x128xf32>
    %269 = arith.mulf %268, %88 : vector<16x128xf32>
    %270 = vector.broadcast %21 : f32 to vector<16x128xf32>
    %271 = arith.mulf %270, %107 : vector<16x128xf32>
    %272 = arith.addf %267, %271 : vector<16x128xf32>
    %273 = vector.broadcast %37 : f32 to vector<16x128xf32>
    %274 = arith.mulf %273, %107 : vector<16x128xf32>
    %275 = arith.addf %269, %274 : vector<16x128xf32>
    %276 = vector.broadcast %22 : f32 to vector<16x128xf32>
    %277 = arith.mulf %276, %126 : vector<16x128xf32>
    %278 = arith.addf %272, %277 : vector<16x128xf32>
    %279 = vector.broadcast %38 : f32 to vector<16x128xf32>
    %280 = arith.mulf %279, %126 : vector<16x128xf32>
    %281 = arith.addf %275, %280 : vector<16x128xf32>
    %282 = vector.broadcast %23 : f32 to vector<16x128xf32>
    %283 = arith.mulf %282, %145 : vector<16x128xf32>
    %284 = arith.addf %278, %283 : vector<16x128xf32>
    %285 = vector.broadcast %39 : f32 to vector<16x128xf32>
    %286 = arith.mulf %285, %145 : vector<16x128xf32>
    %287 = arith.addf %281, %286 : vector<16x128xf32>
    %c1_i32_56 = arith.constant 1 : i32
    %288 = tpu.dynamic_rotate %284 by %c1_i32_56 dim 0 : vector<16x128xf32>, i32 -> vector<16x128xf32>
    %cst_57 = arith.constant 0.000000e+00 : f32
    %289 = vector.broadcast %cst_57 : f32 to vector<16x128xf32>
    %290 = arith.select %64, %289, %288 : vector<16x128xi1>, vector<16x128xf32>
    %291 = arith.addf %290, %287 : vector<16x128xf32>
    %292 = vector.broadcast %43 : f32 to vector<16x128xf32>
    %293 = arith.addf %291, %292 : vector<16x128xf32>
    %cst_58 = arith.constant 0.000000e+00 : f32
    %294 = vector.broadcast %cst_58 : f32 to vector<16x128xf32>
    %295 = arith.minimumf %293, %294 : vector<16x128xf32>
    %cst_59 = arith.constant 1.000000e+00 : f32
    %296 = vector.broadcast %cst_59 : f32 to vector<16x128xf32>
    %297 = arith.mulf %295, %296 : vector<16x128xf32>
    %298 = math.exp %297 : vector<16x128xf32>
    %cst_60 = arith.constant 1.000000e+00 : f32
    %299 = vector.broadcast %cst_60 : f32 to vector<16x128xf32>
    %300 = arith.subf %298, %299 : vector<16x128xf32>
    %cst_61 = arith.constant 1.000000e+00 : f32
    %301 = vector.broadcast %cst_61 : f32 to vector<16x128xf32>
    %302 = arith.mulf %301, %300 : vector<16x128xf32>
    %cst_62 = arith.constant 0.000000e+00 : f32
    %303 = vector.broadcast %cst_62 : f32 to vector<16x128xf32>
    %304 = arith.cmpf ogt, %293, %303 : vector<16x128xf32>
    %305 = arith.select %304, %293, %302 : vector<16x128xi1>, vector<16x128xf32>
    %306 = vector.broadcast %44 : f32 to vector<16x128xf32>
    %307 = arith.mulf %306, %185 : vector<16x128xf32>
    %308 = vector.broadcast %48 : f32 to vector<16x128xf32>
    %309 = arith.mulf %308, %185 : vector<16x128xf32>
    %310 = vector.broadcast %45 : f32 to vector<16x128xf32>
    %311 = arith.mulf %310, %225 : vector<16x128xf32>
    %312 = arith.addf %307, %311 : vector<16x128xf32>
    %313 = vector.broadcast %49 : f32 to vector<16x128xf32>
    %314 = arith.mulf %313, %225 : vector<16x128xf32>
    %315 = arith.addf %309, %314 : vector<16x128xf32>
    %316 = vector.broadcast %46 : f32 to vector<16x128xf32>
    %317 = arith.mulf %316, %265 : vector<16x128xf32>
    %318 = arith.addf %312, %317 : vector<16x128xf32>
    %319 = vector.broadcast %50 : f32 to vector<16x128xf32>
    %320 = arith.mulf %319, %265 : vector<16x128xf32>
    %321 = arith.addf %315, %320 : vector<16x128xf32>
    %322 = vector.broadcast %47 : f32 to vector<16x128xf32>
    %323 = arith.mulf %322, %305 : vector<16x128xf32>
    %324 = arith.addf %318, %323 : vector<16x128xf32>
    %325 = vector.broadcast %51 : f32 to vector<16x128xf32>
    %326 = arith.mulf %325, %305 : vector<16x128xf32>
    %327 = arith.addf %321, %326 : vector<16x128xf32>
    %c1_i32_63 = arith.constant 1 : i32
    %328 = tpu.dynamic_rotate %324 by %c1_i32_63 dim 0 : vector<16x128xf32>, i32 -> vector<16x128xf32>
    %cst_64 = arith.constant 0.000000e+00 : f32
    %329 = vector.broadcast %cst_64 : f32 to vector<16x128xf32>
    %330 = arith.select %64, %329, %328 : vector<16x128xi1>, vector<16x128xf32>
    %331 = arith.addf %330, %327 : vector<16x128xf32>
    %332 = vector.broadcast %52 : f32 to vector<16x128xf32>
    %333 = arith.addf %331, %332 : vector<16x128xf32>
    %c0_65 = arith.constant 0 : index
    %c0_66 = arith.constant 0 : index
    %c0_67 = arith.constant 0 : index
    %334 = vector.load %arg4[%c0_65, %c0_66, %c0_67] : memref<2x16x128xf32, #tpu.memory_space<vmem>>, vector<1x16x128xf32>
    %335 = vector.shape_cast %334 : vector<1x16x128xf32> to vector<16x128xf32>
    %336 = vector.shape_cast %333 : vector<16x128xf32> to vector<1x16x128xf32>
    tpu.vector_store %arg4[%c0_65, %c0_66, %c0_67], %336 {strides = array<i32>} : memref<2x16x128xf32, #tpu.memory_space<vmem>>, vector<1x16x128xf32>,
    %337 = vector.broadcast %53 : f32 to vector<16x128xf32>
    %338 = arith.mulf %337, %185 : vector<16x128xf32>
    %339 = vector.broadcast %57 : f32 to vector<16x128xf32>
    %340 = arith.mulf %339, %185 : vector<16x128xf32>
    %341 = vector.broadcast %54 : f32 to vector<16x128xf32>
    %342 = arith.mulf %341, %225 : vector<16x128xf32>
    %343 = arith.addf %338, %342 : vector<16x128xf32>
    %344 = vector.broadcast %58 : f32 to vector<16x128xf32>
    %345 = arith.mulf %344, %225 : vector<16x128xf32>
    %346 = arith.addf %340, %345 : vector<16x128xf32>
    %347 = vector.broadcast %55 : f32 to vector<16x128xf32>
    %348 = arith.mulf %347, %265 : vector<16x128xf32>
    %349 = arith.addf %343, %348 : vector<16x128xf32>
    %350 = vector.broadcast %59 : f32 to vector<16x128xf32>
    %351 = arith.mulf %350, %265 : vector<16x128xf32>
    %352 = arith.addf %346, %351 : vector<16x128xf32>
    %353 = vector.broadcast %56 : f32 to vector<16x128xf32>
    %354 = arith.mulf %353, %305 : vector<16x128xf32>
    %355 = arith.addf %349, %354 : vector<16x128xf32>
    %356 = vector.broadcast %60 : f32 to vector<16x128xf32>
    %357 = arith.mulf %356, %305 : vector<16x128xf32>
    %358 = arith.addf %352, %357 : vector<16x128xf32>
    %c1_i32_68 = arith.constant 1 : i32
    %359 = tpu.dynamic_rotate %355 by %c1_i32_68 dim 0 : vector<16x128xf32>, i32 -> vector<16x128xf32>
    %cst_69 = arith.constant 0.000000e+00 : f32
    %360 = vector.broadcast %cst_69 : f32 to vector<16x128xf32>
    %361 = arith.select %64, %360, %359 : vector<16x128xi1>, vector<16x128xf32>
    %362 = arith.addf %361, %358 : vector<16x128xf32>
    %363 = vector.broadcast %61 : f32 to vector<16x128xf32>
    %364 = arith.addf %362, %363 : vector<16x128xf32>
    %c1_70 = arith.constant 1 : index
    %c0_71 = arith.constant 0 : index
    %c0_72 = arith.constant 0 : index
    %365 = vector.load %arg4[%c1_70, %c0_71, %c0_72] : memref<2x16x128xf32, #tpu.memory_space<vmem>>, vector<1x16x128xf32>
    %366 = vector.shape_cast %365 : vector<1x16x128xf32> to vector<16x128xf32>
    %367 = vector.shape_cast %364 : vector<16x128xf32> to vector<1x16x128xf32>
    tpu.vector_store %arg4[%c1_70, %c0_71, %c0_72], %367 {strides = array<i32>} : memref<2x16x128xf32, #tpu.memory_space<vmem>>, vector<1x16x128xf32>,
    return
  }
  func.func @transform_0(%arg0: i32, %arg1: memref<62xf32, #tpu.memory_space<smem>>) -> (i32, i32, i32) {
    %c0_i32 = arith.constant 0 : i32
    %c0_i32_0 = arith.constant 0 : i32
    %c0_i32_1 = arith.constant 0 : i32
    return %c0_i32, %c0_i32_0, %arg0 : i32, i32, i32
  }
  func.func @transform_1(%arg0: i32, %arg1: memref<62xf32, #tpu.memory_space<smem>>) -> (i32, i32, i32) {
    %c0_i32 = arith.constant 0 : i32
    %c0_i32_0 = arith.constant 0 : i32
    %c0_i32_1 = arith.constant 0 : i32
    return %c0_i32, %c0_i32_0, %arg0 : i32, i32, i32
  }
  func.func @transform_2(%arg0: i32, %arg1: memref<62xf32, #tpu.memory_space<smem>>) -> (i32, i32, i32) {
    %c0_i32 = arith.constant 0 : i32
    %c0_i32_0 = arith.constant 0 : i32
    %c0_i32_1 = arith.constant 0 : i32
    return %c0_i32, %c0_i32_0, %arg0 : i32, i32, i32
  }
}

</mosaic_0001>

<llo_original>
// kernel: squeeze.10
$region0: #{squeeze.10}
  %s0 = inlined_call_operand.vmem [shape: f32[4,4,1], index: 0, kind: input, shape index: {}]
  %s1 = inlined_call_operand.vmem [shape: f32[16], index: 1, kind: output, shape index: {}]
  $region1: #{squeeze.10} parent=0
    #allocation0 [shape = 'u8[4096]{0}', space=vmem, size = 0x1000, scoped, tag = 'scoped mem for output reshape']
    #allocation1 [shape = 'u8[4096]{0}', space=vmem, size = 0x1000, scoped, tag = 'scoped mem for input reshape']
    %s3 = sshllo.u32 0, 4
    %v4 = vld [vmem:[%s0] sm:%s3]
    %5 = vst [vmem:[#allocation1] sm:%s3] %v4
    %v6 = vld [vmem:[#allocation1] sm:$0x1]
    %vm7 = vcmask 31744
    %8 = vst.msk [vmem:[#allocation0] sm:$0x1] %vm7, %v6
    %s9 = scalar_lea.vmem [#allocation1], 3
    %v10 = vld [vmem:[%s9] sm:$0x1]
    %11 = vrot.lane.b32.xlu0 %v10, 12
    %v12 = vpop.permute.xlu0 %11
    %vm13 = vcmask 130144
    %14 = vst.msk [vmem:[#allocation0] sm:$0x1] %vm13, %v12
    %s15 = scalar_lea.vmem [#allocation1], 2
    %v16 = vld [vmem:[%s15] sm:$0x1]
    %17 = vrot.lane.b32.xlu0 %v16, 8
    %v18 = vpop.permute.xlu0 %17
    %vm19 = vcmask 97344
    %20 = vst.msk [vmem:[#allocation0] sm:$0x1] %vm19, %v18
    %s21 = scalar_lea.vmem [#allocation1], 1
    %v22 = vld [vmem:[%s21] sm:$0x1]
    %23 = vrot.lane.b32.xlu0 %v22, 4
    %v24 = vpop.permute.xlu0 %23
    %vm25 = vcmask 64544
    %26 = vst.msk [vmem:[#allocation0] sm:$0x1] %vm25, %v24
    %s28 = sshllo.u32 0, 1
    %v30 = vld [vmem:[#allocation0] sm:%s28]
    %s31 = sshllo.u32 0, 1
    %32 = vst [vmem:[%s1] sm:%s31] %v30

// kernel: ar_multi_conv.1
$region0: #{ar_multi_conv.1}
  #allocation0 [shape = 'u32[]', space=smem, size = 0x4, offset = 0x4, fixed_abs, tag = 'smem constant byte address 0x4 - core index']
  #allocation1 [shape = 'u32[144,128]{1,0:T(1,128)}', space=vmem, size = 0x12000, scoped, tag = 'internal scratch']
  #allocation2 [shape = 's32[1]{0}', space=sflag, size = 0x4, scoped, tag = 'scoped memory for ar_multi_conv.1']
  #allocation3 [shape = 'u8[512]{0}', space=smem, size = 0x200, scoped, tag = 'prefetched SMEM operand 0']
  %s0 = inlined_call_operand.vmem [shape: f32[62], index: 0, kind: input, shape index: {}]
  %s1 = inlined_call_operand.vmem [shape: f32[1,16,128], index: 1, kind: input, shape index: {}]
  %s2 = inlined_call_operand.vmem [shape: f32[4,16,128], index: 2, kind: input, shape index: {}]
  %s3 = inlined_call_operand.vmem [shape: f32[2,16,128], index: 3, kind: output, shape index: {}]
  %s4 = sld [smem:[#allocation0]]
  $region18: #{ar_multi_conv.1} parent=0
    _
  %s6 = ssub.s32 1, %s4
  %s7 = scalar_select 0, %s6, %s4
  %s8 = sshll.u32 %s0, 4
  %s9 = int_to_ptr.vmem [resolvable:$true] %s8
  %11 = dma.vmem_to_smem %s9, 16, [#allocation3], [#allocation2]
  %12 = dma.done [#allocation2], 16
  %13 = sfence
  // Predicated region
  $region2: #{ar_multi_conv.1} parent=0 // pred_check
    _
  $region3: #{ar_multi_conv.1} parent=0 // pred_check_branch
    %15 = sbr.rel (0) target = $region5
  $region4: #{ar_multi_conv.1} parent=0 // pred_region
    _
  $region5: #{ar_multi_conv.1} parent=0 // pred_fallthru
    _
  // Predicated region
  $region6: #{ar_multi_conv.1} parent=0 // pred_check
    _
  $region7: #{ar_multi_conv.1} parent=0 // pred_check_branch
    %17 = sbr.rel (0) target = $region9
  $region8: #{ar_multi_conv.1} parent=0 // pred_region
    _
  $region9: #{ar_multi_conv.1} parent=0 // pred_fallthru
    _
  %s18 = sld [smem:[#allocation3]]
  %s19 = sld [smem:[#allocation3 + $0x1]]
  %s20 = sld [smem:[#allocation3 + $0x2]]
  %s21 = sld [smem:[#allocation3 + $0x3]]
  %s22 = sld [smem:[#allocation3 + $0x4]]
  %s23 = sld [smem:[#allocation3 + $0x5]]
  %s24 = sld [smem:[#allocation3 + $0x6]]
  %s25 = sld [smem:[#allocation3 + $0x7]]
  %s26 = sld [smem:[#allocation3 + $0x8]]
  %s27 = sld [smem:[#allocation3 + $0x9]]
  %s28 = sld [smem:[#allocation3 + $0xa]]
  %s29 = sld [smem:[#allocation3 + $0xb]]
  %s30 = sld [smem:[#allocation3 + $0xc]]
  %s31 = sld [smem:[#allocation3 + $0xd]]
  %s32 = sld [smem:[#allocation3 + $0xe]]
  %s33 = sld [smem:[#allocation3 + $0xf]]
  %s34 = sld [smem:[#allocation3 + $0x10]]
  %s35 = sld [smem:[#allocation3 + $0x11]]
  %s36 = sld [smem:[#allocation3 + $0x12]]
  %s37 = sld [smem:[#allocation3 + $0x13]]
  %s38 = sld [smem:[#allocation3 + $0x14]]
  %s39 = sld [smem:[#allocation3 + $0x15]]
  %s40 = sld [smem:[#allocation3 + $0x16]]
  %s41 = sld [smem:[#allocation3 + $0x17]]
  %s42 = sld [smem:[#allocation3 + $0x18]]
  %s43 = sld [smem:[#allocation3 + $0x19]]
  %s44 = sld [smem:[#allocation3 + $0x1a]]
  %s45 = sld [smem:[#allocation3 + $0x1b]]
  %s46 = sld [smem:[#allocation3 + $0x1c]]
  %s47 = sld [smem:[#allocation3 + $0x1d]]
  %s48 = sld [smem:[#allocation3 + $0x1e]]
  %s49 = sld [smem:[#allocation3 + $0x1f]]
  %s50 = sld [smem:[#allocation3 + $0x20]]
  %s51 = sld [smem:[#allocation3 + $0x21]]
  %s52 = sld [smem:[#allocation3 + $0x22]]
  %s53 = sld [smem:[#allocation3 + $0x23]]
  %s54 = sld [smem:[#allocation3 + $0x24]]
  %s55 = sld [smem:[#allocation3 + $0x25]]
  %s56 = sld [smem:[#allocation3 + $0x26]]
  %s57 = sld [smem:[#allocation3 + $0x27]]
  %s58 = sld [smem:[#allocation3 + $0x28]]
  %s59 = sld [smem:[#allocation3 + $0x29]]
  %s60 = sld [smem:[#allocation3 + $0x2a]]
  %s61 = sld [smem:[#allocation3 + $0x2b]]
  %s62 = sld [smem:[#allocation3 + $0x2c]]
  %s63 = sld [smem:[#allocation3 + $0x2d]]
  %s64 = sld [smem:[#allocation3 + $0x2e]]
  %s65 = sld [smem:[#allocation3 + $0x2f]]
  %s66 = sld [smem:[#allocation3 + $0x30]]
  %s67 = sld [smem:[#allocation3 + $0x31]]
  %s68 = sld [smem:[#allocation3 + $0x32]]
  %s69 = sld [smem:[#allocation3 + $0x33]]
  %s70 = sld [smem:[#allocation3 + $0x34]]
  %s71 = sld [smem:[#allocation3 + $0x35]]
  %s72 = sld [smem:[#allocation3 + $0x36]]
  %s73 = sld [smem:[#allocation3 + $0x37]]
  %s74 = sld [smem:[#allocation3 + $0x38]]
  %s75 = sld [smem:[#allocation3 + $0x39]]
  %s76 = sld [smem:[#allocation3 + $0x3a]]
  %s77 = sld [smem:[#allocation3 + $0x3b]]
  %s78 = sld [smem:[#allocation3 + $0x3c]]
  %s79 = sld [smem:[#allocation3 + $0x3d]]
  %v80 = vlaneseq
  %v81 = vshrl.u32 %v80, 7
  %v82 = vadd.s32 %v81, 8
  %vm83 = vcmp.eq.s32.totalorder %v81, 0
  %vm84 = vcmp.eq.s32.totalorder %v82, 0
  %v85 = vld [vmem:[%s1] sm:$0xff]
  %v86 = vld [vmem:[%s1 + $0x8] sm:$0xff]
  %v87 = vrot.slane %v85, 7
  %v88 = vrot.slane %v86, 7
  %vm89 = vcmp.lt.s32.totalorder %v81, 1
  %v90 = vsel %vm89, %v87, %v88
  %v91 = vsel %vm89, %v88, %v87
  %v92 = vsel %vm83, 0.0, %v91
  %v93 = vsel %vm84, 0.0, %v90
  %v94 = vstv %s18
  %v95 = vmul.f32 %v94, %v92
  %v96 = vmul.f32 %v94, %v93
  %v97 = vstv %s22
  %v98 = vadd.f32 %v95, %v97
  %v99 = vadd.f32 %v96, %v97
  %v100 = vld [vmem:[%s2] sm:$0xff]
  %v101 = vld [vmem:[%s2 + $0x8] sm:$0xff]
  %v102 = vadd.f32 %v98, %v100
  %v103 = vadd.f32 %v99, %v101
  %v104 = vmin.f32 %v102, 0.0
  %v105 = vmin.f32 %v103, 0.0
  %v106 = vmul.f32 %v104, 1.442695
  %v107 = vpow.pop %v106
  %v108 = vmul.f32 %v105, 1.442695
  %v109 = vpow.pop %v108
  %v110 = vsub.f32 %v107, 1.0
  %v111 = vsub.f32 %v109, 1.0
  %vm112 = vcmp.gt.f32.partialorder %v102, 0.0
  %vm113 = vcmp.gt.f32.partialorder %v103, 0.0
  %v114 = vsel %vm112, %v102, %v110
  %v115 = vsel %vm113, %v103, %v111
  %v116 = vstv %s19
  %v117 = vmul.f32 %v116, %v92
  %v118 = vmul.f32 %v116, %v93
  %v119 = vstv %s23
  %v120 = vadd.f32 %v117, %v119
  %v121 = vadd.f32 %v118, %v119
  %s122 = scalar_lea.vmem %s2, 16
  %v123 = vld [vmem:[%s122] sm:$0xff]
  %v124 = vld [vmem:[%s122 + $0x8] sm:$0xff]
  %v125 = vadd.f32 %v120, %v123
  %v126 = vadd.f32 %v121, %v124
  %v127 = vmin.f32 %v125, 0.0
  %v128 = vmin.f32 %v126, 0.0
  %v129 = vmul.f32 %v127, 1.442695
  %v130 = vpow.pop %v129
  %v131 = vmul.f32 %v128, 1.442695
  %v132 = vpow.pop %v131
  %v133 = vsub.f32 %v130, 1.0
  %v134 = vsub.f32 %v132, 1.0
  %vm135 = vcmp.gt.f32.partialorder %v125, 0.0
  %vm136 = vcmp.gt.f32.partialorder %v126, 0.0
  %v137 = vsel %vm135, %v125, %v133
  %v138 = vsel %vm136, %v126, %v134
  %v139 = vstv %s20
  %v140 = vmul.f32 %v139, %v92
  %v141 = vmul.f32 %v139, %v93
  %v142 = vstv %s24
  %v143 = vadd.f32 %v140, %v142
  %v144 = vadd.f32 %v141, %v142
  %s145 = scalar_lea.vmem %s2, 32
  %v146 = vld [vmem:[%s145] sm:$0xff]
  %v147 = vld [vmem:[%s145 + $0x8] sm:$0xff]
  %v148 = vadd.f32 %v143, %v146
  %v149 = vadd.f32 %v144, %v147
  %v150 = vmin.f32 %v148, 0.0
  %v151 = vmin.f32 %v149, 0.0
  %v152 = vmul.f32 %v150, 1.442695
  %v153 = vpow.pop %v152
  %v154 = vmul.f32 %v151, 1.442695
  %v155 = vpow.pop %v154
  %v156 = vsub.f32 %v153, 1.0
  %v157 = vsub.f32 %v155, 1.0
  %vm158 = vcmp.gt.f32.partialorder %v148, 0.0
  %vm159 = vcmp.gt.f32.partialorder %v149, 0.0
  %v160 = vsel %vm158, %v148, %v156
  %v161 = vsel %vm159, %v149, %v157
  %v162 = vstv %s21
  %v163 = vmul.f32 %v162, %v92
  %v164 = vmul.f32 %v162, %v93
  %v165 = vstv %s25
  %v166 = vadd.f32 %v163, %v165
  %v167 = vadd.f32 %v164, %v165
  %s168 = scalar_lea.vmem %s2, 48
  %v169 = vld [vmem:[%s168] sm:$0xff]
  %v170 = vld [vmem:[%s168 + $0x8] sm:$0xff]
  %v171 = vadd.f32 %v166, %v169
  %v172 = vadd.f32 %v167, %v170
  %v173 = vmin.f32 %v171, 0.0
  %v174 = vmin.f32 %v172, 0.0
  %v175 = vmul.f32 %v173, 1.442695
  %v176 = vpow.pop %v175
  %v177 = vmul.f32 %v174, 1.442695
  %v178 = vpow.pop %v177
  %v179 = vsub.f32 %v176, 1.0
  %v180 = vsub.f32 %v178, 1.0
  %vm181 = vcmp.gt.f32.partialorder %v171, 0.0
  %vm182 = vcmp.gt.f32.partialorder %v172, 0.0
  %v183 = vsel %vm181, %v171, %v179
  %v184 = vsel %vm182, %v172, %v180
  %v185 = vstv %s26
  %v186 = vmul.f32 %v185, %v114
  %v187 = vmul.f32 %v185, %v115
  %v188 = vstv %s42
  %v189 = vmul.f32 %v188, %v114
  %v190 = vmul.f32 %v188, %v115
  %v191 = vstv %s27
  %v192 = vmul.f32 %v191, %v137
  %v193 = vmul.f32 %v191, %v138
  %v194 = vadd.f32 %v186, %v192
  %v195 = vadd.f32 %v187, %v193
  %v196 = vstv %s43
  %v197 = vmul.f32 %v196, %v137
  %v198 = vmul.f32 %v196, %v138
  %v199 = vadd.f32 %v189, %v197
  %v200 = vadd.f32 %v190, %v198
  %v201 = vstv %s28
  %v202 = vmul.f32 %v201, %v160
  %v203 = vmul.f32 %v201, %v161
  %v204 = vadd.f32 %v194, %v202
  %v205 = vadd.f32 %v195, %v203
  %v206 = vstv %s44
  %v207 = vmul.f32 %v206, %v160
  %v208 = vmul.f32 %v206, %v161
  %v209 = vadd.f32 %v199, %v207
  %v210 = vadd.f32 %v200, %v208
  %v211 = vstv %s29
  %v212 = vmul.f32 %v211, %v183
  %v213 = vmul.f32 %v211, %v184
  %v214 = vadd.f32 %v204, %v212
  %v215 = vadd.f32 %v205, %v213
  %v216 = vstv %s45
  %v217 = vmul.f32 %v216, %v183
  %v218 = vmul.f32 %v216, %v184
  %v219 = vadd.f32 %v209, %v217
  %v220 = vadd.f32 %v210, %v218
  %v221 = vrot.slane %v214, 7
  %v222 = vrot.slane %v215, 7
  %v223 = vsel %vm89, %v221, %v222
  %v224 = vsel %vm89, %v222, %v221
  %v225 = vsel %vm83, 0.0, %v224
  %v226 = vsel %vm84, 0.0, %v223
  %v227 = vadd.f32 %v225, %v219
  %v228 = vadd.f32 %v226, %v220
  %v229 = vstv %s58
  %v230 = vadd.f32 %v227, %v229
  %v231 = vadd.f32 %v228, %v229
  %v232 = vmin.f32 %v230, 0.0
  %v233 = vmin.f32 %v231, 0.0
  %v234 = vmul.f32 %v232, 1.442695
  %v235 = vpow.pop %v234
  %v236 = vmul.f32 %v233, 1.442695
  %v237 = vpow.pop %v236
  %v238 = vsub.f32 %v235, 1.0
  %v239 = vsub.f32 %v237, 1.0
  %vm240 = vcmp.gt.f32.partialorder %v230, 0.0
  %vm241 = vcmp.gt.f32.partialorder %v231, 0.0
  %v242 = vsel %vm240, %v230, %v238
  %v243 = vsel %vm241, %v231, %v239
  %v244 = vstv %s30
  %v245 = vmul.f32 %v244, %v114
  %v246 = vmul.f32 %v244, %v115
  %v247 = vstv %s46
  %v248 = vmul.f32 %v247, %v114
  %v249 = vmul.f32 %v247, %v115
  %v250 = vstv %s31
  %v251 = vmul.f32 %v250, %v137
  %v252 = vmul.f32 %v250, %v138
  %v253 = vadd.f32 %v245, %v251
  %v254 = vadd.f32 %v246, %v252
  %v255 = vstv %s47
  %v256 = vmul.f32 %v255, %v137
  %v257 = vmul.f32 %v255, %v138
  %v258 = vadd.f32 %v248, %v256
  %v259 = vadd.f32 %v249, %v257
  %v260 = vstv %s32
  %v261 = vmul.f32 %v260, %v160
  %v262 = vmul.f32 %v260, %v161
  %v263 = vadd.f32 %v253, %v261
  %v264 = vadd.f32 %v254, %v262
  %v265 = vstv %s48
  %v266 = vmul.f32 %v265, %v160
  %v267 = vmul.f32 %v265, %v161
  %v268 = vadd.f32 %v258, %v266
  %v269 = vadd.f32 %v259, %v267
  %v270 = vstv %s33
  %v271 = vmul.f32 %v270, %v183
  %v272 = vmul.f32 %v270, %v184
  %v273 = vadd.f32 %v263, %v271
  %v274 = vadd.f32 %v264, %v272
  %v275 = vstv %s49
  %v276 = vmul.f32 %v275, %v183
  %v277 = vmul.f32 %v275, %v184
  %v278 = vadd.f32 %v268, %v276
  %v279 = vadd.f32 %v269, %v277
  %v280 = vrot.slane %v273, 7
  %v281 = vrot.slane %v274, 7
  %v282 = vsel %vm89, %v280, %v281
  %v283 = vsel %vm89, %v281, %v280
  %v284 = vsel %vm83, 0.0, %v283
  %v285 = vsel %vm84, 0.0, %v282
  %v286 = vadd.f32 %v284, %v278
  %v287 = vadd.f32 %v285, %v279
  %v288 = vstv %s59
  %v289 = vadd.f32 %v286, %v288
  %v290 = vadd.f32 %v287, %v288
  %v291 = vmin.f32 %v289, 0.0
  %v292 = vmin.f32 %v290, 0.0
  %v293 = vmul.f32 %v291, 1.442695
  %v294 = vpow.pop %v293
  %v295 = vmul.f32 %v292, 1.442695
  %v296 = vpow.pop %v295
  %v297 = vsub.f32 %v294, 1.0
  %v298 = vsub.f32 %v296, 1.0
  %vm299 = vcmp.gt.f32.partialorder %v289, 0.0
  %vm300 = vcmp.gt.f32.partialorder %v290, 0.0
  %v301 = vsel %vm299, %v289, %v297
  %v302 = vsel %vm300, %v290, %v298
  %v303 = vstv %s34
  %v304 = vmul.f32 %v303, %v114
  %v305 = vmul.f32 %v303, %v115
  %v306 = vstv %s50
  %v307 = vmul.f32 %v306, %v114
  %v308 = vmul.f32 %v306, %v115
  %v309 = vstv %s35
  %v310 = vmul.f32 %v309, %v137
  %v311 = vmul.f32 %v309, %v138
  %v312 = vadd.f32 %v304, %v310
  %v313 = vadd.f32 %v305, %v311
  %v314 = vstv %s51
  %v315 = vmul.f32 %v314, %v137
  %v316 = vmul.f32 %v314, %v138
  %v317 = vadd.f32 %v307, %v315
  %v318 = vadd.f32 %v308, %v316
  %v319 = vstv %s36
  %v320 = vmul.f32 %v319, %v160
  %v321 = vmul.f32 %v319, %v161
  %v322 = vadd.f32 %v312, %v320
  %v323 = vadd.f32 %v313, %v321
  %v324 = vstv %s52
  %v325 = vmul.f32 %v324, %v160
  %v326 = vmul.f32 %v324, %v161
  %v327 = vadd.f32 %v317, %v325
  %v328 = vadd.f32 %v318, %v326
  %v329 = vstv %s37
  %v330 = vmul.f32 %v329, %v183
  %v331 = vmul.f32 %v329, %v184
  %v332 = vadd.f32 %v322, %v330
  %v333 = vadd.f32 %v323, %v331
  %v334 = vstv %s53
  %v335 = vmul.f32 %v334, %v183
  %v336 = vmul.f32 %v334, %v184
  %v337 = vadd.f32 %v327, %v335
  %v338 = vadd.f32 %v328, %v336
  %v339 = vrot.slane %v332, 7
  %v340 = vrot.slane %v333, 7
  %v341 = vsel %vm89, %v339, %v340
  %v342 = vsel %vm89, %v340, %v339
  %v343 = vsel %vm83, 0.0, %v342
  %v344 = vsel %vm84, 0.0, %v341
  %v345 = vadd.f32 %v343, %v337
  %v346 = vadd.f32 %v344, %v338
  %v347 = vstv %s60
  %v348 = vadd.f32 %v345, %v347
  %v349 = vadd.f32 %v346, %v347
  %v350 = vmin.f32 %v348, 0.0
  %v351 = vmin.f32 %v349, 0.0
  %v352 = vmul.f32 %v350, 1.442695
  %v353 = vpow.pop %v352
  %v354 = vmul.f32 %v351, 1.442695
  %v355 = vpow.pop %v354
  %v356 = vsub.f32 %v353, 1.0
  %v357 = vsub.f32 %v355, 1.0
  %vm358 = vcmp.gt.f32.partialorder %v348, 0.0
  %vm359 = vcmp.gt.f32.partialorder %v349, 0.0
  %v360 = vsel %vm358, %v348, %v356
  %v361 = vsel %vm359, %v349, %v357
  %v362 = vstv %s38
  %v363 = vmul.f32 %v362, %v114
  %v364 = vmul.f32 %v362, %v115
  %v365 = vstv %s54
  %v366 = vmul.f32 %v365, %v114
  %v367 = vmul.f32 %v365, %v115
  %v368 = vstv %s39
  %v369 = vmul.f32 %v368, %v137
  %v370 = vmul.f32 %v368, %v138
  %v371 = vadd.f32 %v363, %v369
  %v372 = vadd.f32 %v364, %v370
  %v373 = vstv %s55
  %v374 = vmul.f32 %v373, %v137
  %v375 = vmul.f32 %v373, %v138
  %v376 = vadd.f32 %v366, %v374
  %v377 = vadd.f32 %v367, %v375
  %v378 = vstv %s40
  %v379 = vmul.f32 %v378, %v160
  %v380 = vmul.f32 %v378, %v161
  %v381 = vadd.f32 %v371, %v379
  %v382 = vadd.f32 %v372, %v380
  %v383 = vstv %s56
  %v384 = vmul.f32 %v383, %v160
  %v385 = vmul.f32 %v383, %v161
  %v386 = vadd.f32 %v376, %v384
  %v387 = vadd.f32 %v377, %v385
  %v388 = vstv %s41
  %v389 = vmul.f32 %v388, %v183
  %v390 = vmul.f32 %v388, %v184
  %v391 = vadd.f32 %v381, %v389
  %v392 = vadd.f32 %v382, %v390
  %v393 = vstv %s57
  %v394 = vmul.f32 %v393, %v183
  %v395 = vmul.f32 %v393, %v184
  %v396 = vadd.f32 %v386, %v394
  %v397 = vadd.f32 %v387, %v395
  %v398 = vrot.slane %v391, 7
  %v399 = vrot.slane %v392, 7
  %v400 = vsel %vm89, %v398, %v399
  %v401 = vsel %vm89, %v399, %v398
  %v402 = vsel %vm83, 0.0, %v401
  %v403 = vsel %vm84, 0.0, %v400
  %v404 = vadd.f32 %v402, %v396
  %v405 = vadd.f32 %v403, %v397
  %v406 = vstv %s61
  %v407 = vadd.f32 %v404, %v406
  %v408 = vadd.f32 %v405, %v406
  %v409 = vmin.f32 %v407, 0.0
  %v410 = vmin.f32 %v408, 0.0
  %v411 = vmul.f32 %v409, 1.442695
  %v412 = vpow.pop %v411
  %v413 = vmul.f32 %v410, 1.442695
  %v414 = vpow.pop %v413
  %v415 = vsub.f32 %v412, 1.0
  %v416 = vsub.f32 %v414, 1.0
  %vm417 = vcmp.gt.f32.partialorder %v407, 0.0
  %vm418 = vcmp.gt.f32.partialorder %v408, 0.0
  %v419 = vsel %vm417, %v407, %v415
  %v420 = vsel %vm418, %v408, %v416
  %v421 = vstv %s62
  %v422 = vmul.f32 %v421, %v242
  %v423 = vmul.f32 %v421, %v243
  %v424 = vstv %s66
  %v425 = vmul.f32 %v424, %v242
  %v426 = vmul.f32 %v424, %v243
  %v427 = vstv %s63
  %v428 = vmul.f32 %v427, %v301
  %v429 = vmul.f32 %v427, %v302
  %v430 = vadd.f32 %v422, %v428
  %v431 = vadd.f32 %v423, %v429
  %v432 = vstv %s67
  %v433 = vmul.f32 %v432, %v301
  %v434 = vmul.f32 %v432, %v302
  %v435 = vadd.f32 %v425, %v433
  %v436 = vadd.f32 %v426, %v434
  %v437 = vstv %s64
  %v438 = vmul.f32 %v437, %v360
  %v439 = vmul.f32 %v437, %v361
  %v440 = vadd.f32 %v430, %v438
  %v441 = vadd.f32 %v431, %v439
  %v442 = vstv %s68
  %v443 = vmul.f32 %v442, %v360
  %v444 = vmul.f32 %v442, %v361
  %v445 = vadd.f32 %v435, %v443
  %v446 = vadd.f32 %v436, %v444
  %v447 = vstv %s65
  %v448 = vmul.f32 %v447, %v419
  %v449 = vmul.f32 %v447, %v420
  %v450 = vadd.f32 %v440, %v448
  %v451 = vadd.f32 %v441, %v449
  %v452 = vstv %s69
  %v453 = vmul.f32 %v452, %v419
  %v454 = vmul.f32 %v452, %v420
  %v455 = vadd.f32 %v445, %v453
  %v456 = vadd.f32 %v446, %v454
  %v457 = vrot.slane %v450, 7
  %v458 = vrot.slane %v451, 7
  %v459 = vsel %vm89, %v457, %v458
  %v460 = vsel %vm89, %v458, %v457
  %v461 = vsel %vm83, 0.0, %v460
  %v462 = vsel %vm84, 0.0, %v459
  %v463 = vadd.f32 %v461, %v455
  %v464 = vadd.f32 %v462, %v456
  %v465 = vstv %s70
  %v466 = vadd.f32 %v463, %v465
  %v467 = vadd.f32 %v464, %v465
  %468 = vst [vmem:[%s3] sm:$0xff] %v466
  %469 = vst [vmem:[%s3 + $0x8] sm:$0xff] %v467
  %v470 = vstv %s71
  %v471 = vmul.f32 %v470, %v242
  %v472 = vmul.f32 %v470, %v243
  %v473 = vstv %s75
  %v474 = vmul.f32 %v473, %v242
  %v475 = vmul.f32 %v473, %v243
  %v476 = vstv %s72
  %v477 = vmul.f32 %v476, %v301
  %v478 = vmul.f32 %v476, %v302
  %v479 = vadd.f32 %v471, %v477
  %v480 = vadd.f32 %v472, %v478
  %v481 = vstv %s76
  %v482 = vmul.f32 %v481, %v301
  %v483 = vmul.f32 %v481, %v302
  %v484 = vadd.f32 %v474, %v482
  %v485 = vadd.f32 %v475, %v483
  %v486 = vstv %s73
  %v487 = vmul.f32 %v486, %v360
  %v488 = vmul.f32 %v486, %v361
  %v489 = vadd.f32 %v479, %v487
  %v490 = vadd.f32 %v480, %v488
  %v491 = vstv %s77
  %v492 = vmul.f32 %v491, %v360
  %v493 = vmul.f32 %v491, %v361
  %v494 = vadd.f32 %v484, %v492
  %v495 = vadd.f32 %v485, %v493
  %v496 = vstv %s74
  %v497 = vmul.f32 %v496, %v419
  %v498 = vmul.f32 %v496, %v420
  %v499 = vadd.f32 %v489, %v497
  %v500 = vadd.f32 %v490, %v498
  %v501 = vstv %s78
  %v502 = vmul.f32 %v501, %v419
  %v503 = vmul.f32 %v501, %v420
  %v504 = vadd.f32 %v494, %v502
  %v505 = vadd.f32 %v495, %v503
  %v506 = vrot.slane %v499, 7
  %v507 = vrot.slane %v500, 7
  %v508 = vsel %vm89, %v506, %v507
  %v509 = vsel %vm89, %v507, %v506
  %v510 = vsel %vm83, 0.0, %v509
  %v511 = vsel %vm84, 0.0, %v508
  %v512 = vadd.f32 %v510, %v504
  %v513 = vadd.f32 %v511, %v505
  %v514 = vstv %s79
  %v515 = vadd.f32 %v512, %v514
  %v516 = vadd.f32 %v513, %v514
  %s517 = scalar_lea.vmem %s3, 16
  %518 = vst [vmem:[%s517] sm:$0xff] %v515
  %519 = vst [vmem:[%s517 + $0x8] sm:$0xff] %v516
  // Predicated region
  $region10: #{ar_multi_conv.1} parent=0 // pred_check
    _
  $region11: #{ar_multi_conv.1} parent=0 // pred_check_branch
    %521 = sbr.rel (0) target = $region13
  $region12: #{ar_multi_conv.1} parent=0 // pred_region
    _
  $region13: #{ar_multi_conv.1} parent=0 // pred_fallthru
    _
  // Predicated region
  $region14: #{ar_multi_conv.1} parent=0 // pred_check
    _
  $region15: #{ar_multi_conv.1} parent=0 // pred_check_branch
    %523 = sbr.rel (0) target = $region17
  $region16: #{ar_multi_conv.1} parent=0 // pred_region
    _
  $region17: #{ar_multi_conv.1} parent=0 // pred_fallthru
    _

</llo_original>
